<compile_context>
chip_gen: v5e
topology: v5e:2x2
jax: 0.10.0
libtpu: 0.0.40
codegen_flags: <defaults>
</compile_context>

<pallas_src>
import functools

import jax
import jax.numpy as jnp
from jax import lax
from jax.experimental import pallas as pl
from jax.experimental.pallas import tpu as pltpu

LANES = 128
SUBLANES = 8
CH_MAX = 128                          # rows per in-kernel compute chunk
BLOCK_BYTES_BUDGET = 4 * 1024 * 1024  # per input, per pipeline buffer
VMEM_LIMIT_BYTES = 40 * 1024 * 1024   # 2 in x 2 buf x 4 MiB = 16 MiB + slack


def _dice_kernel(tm, ch, rows, need_mask, p_ref, t_ref, out_ref):
    """Grid = (row_block,). out_ref block is (3, 8, 128):
       [0]=sum(p*t), [1]=sum(p), [2]=sum(t) as per-lane/per-sublane partials."""
    i = pl.program_id(0)
    nblk = pl.num_programs(0)
    n_chunks = tm // ch

    @pl.when(i == 0)
    def _init():
        out_ref[...] = jnp.zeros_like(out_ref)

    def chunk_body(j, carry, masked):
        acc_it, acc_p, acc_t = carry
        r0 = pl.multiple_of(j * ch, ch)
        x = p_ref[pl.ds(r0, ch), :].astype(jnp.float32)
        # sigmoid(x) == 0.5*(tanh(x/2)+1): one EUP transcendental per element.
        pc = 0.5 * (jnp.tanh(0.5 * x) + 1.0)
        tc = t_ref[pl.ds(r0, ch), :].astype(jnp.float32)
        if masked:
            # Only reached on the last row block: zero OOB (undefined) rows.
            row_idx = (i * tm + r0) + jax.lax.broadcasted_iota(
                jnp.int32, (ch, LANES), 0)
            valid = row_idx < rows
            pc = jnp.where(valid, pc, 0.0)
            tc = jnp.where(valid, tc, 0.0)
        # VPU-only partial reduce: (ch,128) -> (ch//8, 8, 128) -> (8,128)
        acc_it = acc_it + jnp.sum(
            (pc * tc).reshape(ch // SUBLANES, SUBLANES, LANES), axis=0)
        acc_p = acc_p + jnp.sum(
            pc.reshape(ch // SUBLANES, SUBLANES, LANES), axis=0)
        acc_t = acc_t + jnp.sum(
            tc.reshape(ch // SUBLANES, SUBLANES, LANES), axis=0)
        return acc_it, acc_p, acc_t

    def accumulate(masked):
        zeros = jnp.zeros((SUBLANES, LANES), jnp.float32)
        acc_it, acc_p, acc_t = lax.fori_loop(
            0, n_chunks,
            lambda j, c: chunk_body(j, c, masked),
            (zeros, zeros, zeros),
            unroll=min(4, n_chunks))
        # Single VMEM read-modify-write per grid step (not per chunk).
        out_ref[0] += acc_it
        out_ref[1] += acc_p
        out_ref[2] += acc_t

    if need_mask:
        pl.when(i < nblk - 1)(lambda: accumulate(False))   # hot path, unmasked
        pl.when(i == nblk - 1)(lambda: accumulate(True))   # masked epilogue
    else:
        accumulate(False)


def dice_loss(prediction, target, smooth=1e-07):
    """Pallas implementation of dice_loss.forward. Returns a scalar f32."""
    assert prediction.shape == target.shape
    n = int(prediction.size)

    # Native dtypes all the way in (cast happens in-kernel); reshape only.
    p_flat = prediction.reshape(-1)
    t_flat = target.reshape(-1)

    row_chunk = SUBLANES * LANES            # 1024 elements per (8,128) tile
    n_main = n - (n % row_chunk)

    # Ragged tail (<1024 elems): fold in with plain JAX -- no full-array pad.
    if n_main != n:
        pt = jax.nn.sigmoid(p_flat[n_main:].astype(jnp.float32))
        tt = t_flat[n_main:].astype(jnp.float32)
        tail = jnp.stack([jnp.sum(pt * tt), jnp.sum(pt), jnp.sum(tt)])
    else:
        tail = jnp.zeros((3,), jnp.float32)

    if n_main == 0:
        # Too small for even one (8,128) tile: pure JAX.
        inter, p_sum, t_sum = tail[0], tail[1], tail[2]
        score = (2.0 * inter + smooth) / (p_sum + t_sum + smooth)
        return 1.0 - score

    rows = n_main // LANES
    p2 = p_flat[:n_main].reshape(rows, LANES)
    t2 = t_flat[:n_main].reshape(rows, LANES)

    # Row-block size: ~4 MiB per input per pipeline buffer (dtype-aware).
    itemsize = max(p2.dtype.itemsize, t2.dtype.itemsize)
    tm_max = max(CH_MAX, BLOCK_BYTES_BUDGET // (LANES * itemsize))
    tm_max -= tm_max % CH_MAX               # keep a multiple of the chunk size
    if rows >= tm_max:
        tm = tm_max
    elif rows >= CH_MAX:
        tm = (rows // CH_MAX) * CH_MAX      # multiple of 128; tail-block masked
    else:
        tm = rows                           # multiple of 8; block == full dim
    ch = next(c for c in (CH_MAX, 64, 32, 16, 8) if tm % c == 0)

    nblocks = (rows + tm - 1) // tm
    need_mask = (rows % tm) != 0

    parts = pl.pallas_call(
        functools.partial(_dice_kernel, tm, ch, rows, need_mask),
        out_shape=jax.ShapeDtypeStruct((3, SUBLANES, LANES), jnp.float32),
        grid_spec=pltpu.PrefetchScalarGridSpec(
            num_scalar_prefetch=0,
            grid=(nblocks,),
            in_specs=[
                pl.BlockSpec((tm, LANES), lambda i: (i, 0)),
                pl.BlockSpec((tm, LANES), lambda i: (i, 0)),
            ],
            out_specs=pl.BlockSpec((3, SUBLANES, LANES), lambda i: (0, 0, 0)),
        ),
        compiler_params=pltpu.CompilerParams(
            dimension_semantics=("arbitrary",),
            vmem_limit_bytes=VMEM_LIMIT_BYTES),
    )(p2, t2)

    # Final cross-lane reduce + scalar dice formula (tiny, plain JAX).
    sums = jnp.sum(parts, axis=(1, 2)) + tail
    inter, p_sum, t_sum = sums[0], sums[1], sums[2]
    score = (2.0 * inter + smooth) / (p_sum + t_sum + smooth)
    return 1.0 - score


def dice_loss_ref(prediction, target, smooth=1e-07):
    p = jax.nn.sigmoid(prediction.astype(jnp.float32)).reshape(-1)
    t = target.astype(jnp.float32).reshape(-1)
    inter = jnp.sum(p * t)
    score = (2.0 * inter + smooth) / (jnp.sum(p) + jnp.sum(t) + smooth)
    return 1.0 - score


if __name__ == "__main__":
    key = jax.random.PRNGKey(0)

    # Primary case: small NCHW segmentation-head logits + binary mask.
    k1, k2 = jax.random.split(key)
    shape = (2, 4, 16, 16)
    prediction = jax.random.normal(k1, shape, dtype=jnp.float32)
    target = (jax.random.uniform(k2, shape) > 0.5).astype(jnp.float32)
    loss = jax.block_until_ready(dice_loss(prediction, target))
    ref = jax.block_until_ready(dice_loss_ref(prediction, target))
    assert jnp.allclose(loss, ref, atol=1e-5, rtol=1e-5), (loss, ref)

    # Ragged size (exercises the plain-JAX tail path).
    k3, k4 = jax.random.split(k1)
    shape2 = (3, 5, 7, 11)
    pred2 = jax.random.normal(k3, shape2, dtype=jnp.float32)
    tgt2 = (jax.random.uniform(k4, shape2) > 0.5).astype(jnp.float32)
    loss2 = jax.block_until_ready(dice_loss(pred2, tgt2))
    ref2 = jax.block_until_ready(dice_loss_ref(pred2, tgt2))
    assert jnp.allclose(loss2, ref2, atol=1e-5, rtol=1e-5), (loss2, ref2)

    # Size that leaves a partial last row block (exercises masked epilogue).
    k5, k6 = jax.random.split(k3)
    shape3 = (1, 1, 160, 160)
    pred3 = jax.random.normal(k5, shape3, dtype=jnp.float32)
    tgt3 = (jax.random.uniform(k6, shape3) > 0.5).astype(jnp.float32)
    loss3 = jax.block_until_ready(dice_loss(pred3, tgt3))
    ref3 = jax.block_until_ready(dice_loss_ref(pred3, tgt3))
    assert jnp.allclose(loss3, ref3, atol=1e-5, rtol=1e-5), (loss3, ref3)

    print("KERNEL_OK")
</pallas_src>

<mosaic_0001>
module attributes {stable_mosaic.version = 11 : i64} {
  func.func @_dice_kernel(%arg0: i32, %arg1: memref<16x128xf32, #tpu.memory_space<vmem>>, %arg2: memref<16x128xf32, #tpu.memory_space<vmem>>, %arg3: memref<3x8x128xf32, #tpu.memory_space<vmem>>) attributes {dimension_semantics = [#tpu.dimension_semantics<arbitrary>], iteration_bounds = array<i64: 1>, scalar_prefetch = 0 : i64, scratch_operands = 0 : i64, tpu.core_type = #tpu.core_type<tc>, window_params = [{transform_indices = @transform_0, window_bounds = array<i64: 16, 128>}, {transform_indices = @transform_1, window_bounds = array<i64: 16, 128>}, {pipeline_mode = #tpu.pipeline_mode<synchronous>, transform_indices = @transform_2, window_bounds = array<i64: 3, 8, 128>}]} {
    %c0_i32 = arith.constant 0 : i32
    %0 = arith.cmpi eq, %arg0, %c0_i32 : i32
    %1 = arith.extui %0 : i1 to i32
    %c0_i32_0 = arith.constant 0 : i32
    %2 = arith.cmpi ne, %1, %c0_i32_0 : i32
    scf.if %2 {
      %cst_25 = arith.constant 0.000000e+00 : f32
      %45 = vector.broadcast %cst_25 : f32 to vector<3x8x128xf32>
      %c0_26 = arith.constant 0 : index
      %c0_27 = arith.constant 0 : index
      %c0_28 = arith.constant 0 : index
      %46 = vector.load %arg3[%c0_26, %c0_27, %c0_28] : memref<3x8x128xf32, #tpu.memory_space<vmem>>, vector<3x8x128xf32>
      tpu.vector_store %arg3[%c0_26, %c0_27, %c0_28], %45 {strides = array<i32>} : memref<3x8x128xf32, #tpu.memory_space<vmem>>, vector<3x8x128xf32>,
    } else {
    }
    %cst = arith.constant 0.000000e+00 : f32
    %3 = vector.broadcast %cst : f32 to vector<8x128xf32>
    %c0_i32_1 = arith.constant 0 : i32
    %c16_i32 = arith.constant 16 : i32
    %4 = arith.muli %c0_i32_1, %c16_i32 : i32
    %5 = tpu.assume_multiple %4, 16 : i32
    %6 = arith.index_cast %5 : i32 to index
    %c0 = arith.constant 0 : index
    %7 = vector.load %arg1[%6, %c0] : memref<16x128xf32, #tpu.memory_space<vmem>>, vector<16x128xf32>
    %cst_2 = arith.constant 5.000000e-01 : f32
    %8 = vector.broadcast %cst_2 : f32 to vector<16x128xf32>
    %9 = arith.mulf %8, %7 : vector<16x128xf32>
    %10 = math.tanh %9 : vector<16x128xf32>
    %cst_3 = arith.constant 1.000000e+00 : f32
    %11 = vector.broadcast %cst_3 : f32 to vector<16x128xf32>
    %12 = arith.addf %10, %11 : vector<16x128xf32>
    %cst_4 = arith.constant 5.000000e-01 : f32
    %13 = vector.broadcast %cst_4 : f32 to vector<16x128xf32>
    %14 = arith.mulf %13, %12 : vector<16x128xf32>
    %15 = arith.index_cast %5 : i32 to index
    %c0_5 = arith.constant 0 : index
    %16 = vector.load %arg2[%15, %c0_5] : memref<16x128xf32, #tpu.memory_space<vmem>>, vector<16x128xf32>
    %17 = arith.mulf %14, %16 : vector<16x128xf32>
    %18 = vector.shape_cast %17 : vector<16x128xf32> to vector<2x8x128xf32>
    %cst_6 = arith.constant dense<0.000000e+00> : vector<8x128xf32>
    %19 = vector.multi_reduction <add>, %18, %cst_6 [0] : vector<2x8x128xf32> to vector<8x128xf32>
    %20 = arith.addf %3, %19 : vector<8x128xf32>
    %21 = vector.shape_cast %14 : vector<16x128xf32> to vector<2x8x128xf32>
    %cst_7 = arith.constant dense<0.000000e+00> : vector<8x128xf32>
    %22 = vector.multi_reduction <add>, %21, %cst_7 [0] : vector<2x8x128xf32> to vector<8x128xf32>
    %23 = arith.addf %3, %22 : vector<8x128xf32>
    %24 = vector.shape_cast %16 : vector<16x128xf32> to vector<2x8x128xf32>
    %cst_8 = arith.constant dense<0.000000e+00> : vector<8x128xf32>
    %25 = vector.multi_reduction <add>, %24, %cst_8 [0] : vector<2x8x128xf32> to vector<8x128xf32>
    %26 = arith.addf %3, %25 : vector<8x128xf32>
    %c1_i32 = arith.constant 1 : i32
    %c0_9 = arith.constant 0 : index
    %c0_10 = arith.constant 0 : index
    %c0_11 = arith.constant 0 : index
    %27 = vector.load %arg3[%c0_9, %c0_10, %c0_11] : memref<3x8x128xf32, #tpu.memory_space<vmem>>, vector<1x8x128xf32>
    %28 = vector.shape_cast %27 : vector<1x8x128xf32> to vector<8x128xf32>
    %29 = arith.addf %28, %20 : vector<8x128xf32>
    %c0_12 = arith.constant 0 : index
    %c0_13 = arith.constant 0 : index
    %c0_14 = arith.constant 0 : index
    %30 = vector.load %arg3[%c0_12, %c0_13, %c0_14] : memref<3x8x128xf32, #tpu.memory_space<vmem>>, vector<1x8x128xf32>
    %31 = vector.shape_cast %30 : vector<1x8x128xf32> to vector<8x128xf32>
    %32 = vector.shape_cast %29 : vector<8x128xf32> to vector<1x8x128xf32>
    tpu.vector_store %arg3[%c0_12, %c0_13, %c0_14], %32 {strides = array<i32>} : memref<3x8x128xf32, #tpu.memory_space<vmem>>, vector<1x8x128xf32>,
    %c1 = arith.constant 1 : index
    %c0_15 = arith.constant 0 : index
    %c0_16 = arith.constant 0 : index
    %33 = vector.load %arg3[%c1, %c0_15, %c0_16] : memref<3x8x128xf32, #tpu.memory_space<vmem>>, vector<1x8x128xf32>
    %34 = vector.shape_cast %33 : vector<1x8x128xf32> to vector<8x128xf32>
    %35 = arith.addf %34, %23 : vector<8x128xf32>
    %c1_17 = arith.constant 1 : index
    %c0_18 = arith.constant 0 : index
    %c0_19 = arith.constant 0 : index
    %36 = vector.load %arg3[%c1_17, %c0_18, %c0_19] : memref<3x8x128xf32, #tpu.memory_space<vmem>>, vector<1x8x128xf32>
    %37 = vector.shape_cast %36 : vector<1x8x128xf32> to vector<8x128xf32>
    %38 = vector.shape_cast %35 : vector<8x128xf32> to vector<1x8x128xf32>
    tpu.vector_store %arg3[%c1_17, %c0_18, %c0_19], %38 {strides = array<i32>} : memref<3x8x128xf32, #tpu.memory_space<vmem>>, vector<1x8x128xf32>,
    %c2 = arith.constant 2 : index
    %c0_20 = arith.constant 0 : index
    %c0_21 = arith.constant 0 : index
    %39 = vector.load %arg3[%c2, %c0_20, %c0_21] : memref<3x8x128xf32, #tpu.memory_space<vmem>>, vector<1x8x128xf32>
    %40 = vector.shape_cast %39 : vector<1x8x128xf32> to vector<8x128xf32>
    %41 = arith.addf %40, %26 : vector<8x128xf32>
    %c2_22 = arith.constant 2 : index
    %c0_23 = arith.constant 0 : index
    %c0_24 = arith.constant 0 : index
    %42 = vector.load %arg3[%c2_22, %c0_23, %c0_24] : memref<3x8x128xf32, #tpu.memory_space<vmem>>, vector<1x8x128xf32>
    %43 = vector.shape_cast %42 : vector<1x8x128xf32> to vector<8x128xf32>
    %44 = vector.shape_cast %41 : vector<8x128xf32> to vector<1x8x128xf32>
    tpu.vector_store %arg3[%c2_22, %c0_23, %c0_24], %44 {strides = array<i32>} : memref<3x8x128xf32, #tpu.memory_space<vmem>>, vector<1x8x128xf32>,
    return
  }
  func.func @transform_0(%arg0: i32) -> (i32, i32) {
    %c0_i32 = arith.constant 0 : i32
    %c0_i32_0 = arith.constant 0 : i32
    return %arg0, %c0_i32 : i32, i32
  }
  func.func @transform_1(%arg0: i32) -> (i32, i32) {
    %c0_i32 = arith.constant 0 : i32
    %c0_i32_0 = arith.constant 0 : i32
    return %arg0, %c0_i32 : i32, i32
  }
  func.func @transform_2(%arg0: i32) -> (i32, i32, i32) {
    %c0_i32 = arith.constant 0 : i32
    %c0_i32_0 = arith.constant 0 : i32
    %c0_i32_1 = arith.constant 0 : i32
    %c0_i32_2 = arith.constant 0 : i32
    return %c0_i32, %c0_i32_0, %c0_i32_1 : i32, i32, i32
  }
}

</mosaic_0001>

<llo_original>
// kernel: tpu_custom_call.1
$region0: #{tpu_custom_call.1}
  #allocation0 [shape = 'u32[]', space=smem, size = 0x4, offset = 0x4, fixed_abs, tag = 'smem constant byte address 0x4 - core index']
  #allocation1 [shape = 'u32[72,128]{1,0:T(1,128)}', space=vmem, size = 0x9000, scoped, tag = 'internal scratch']
  %s0 = inlined_call_operand.hbm [shape: f32[16,128], index: 0, kind: input, shape index: {}]
  %s1 = inlined_call_operand.hbm [shape: f32[16,128], index: 1, kind: input, shape index: {}]
  %s2 = inlined_call_operand.hbm [shape: f32[3,8,128], index: 2, kind: output, shape index: {}]
  %s3 = sld [smem:[#allocation0]]
  $region30: #{tpu_custom_call.1} parent=0
    _
  %s5 = ssub.s32 1, %s3
  %s6 = scalar_select 0, %s5, %s3
  $region1: #{tpu_custom_call.1} parent=0
    #allocation2 [shape = 'u8[8192]{0}', space=vmem, size = 0x2000, scoped, tag = 'input window, operand 0, single buffered']
    #allocation3 [shape = 's32[1]{0}', space=sflag, size = 0x4, scoped, tag = 'scoped memory for tpu_custom_call.1']
    #allocation4 [shape = 's32[1]{0}', space=sflag, size = 0x4, scoped, tag = 'scoped memory for tpu_custom_call.1']
    #allocation5 [shape = 'u8[8192]{0}', space=vmem, size = 0x2000, scoped, tag = 'input window, operand 1, single buffered']
    #allocation6 [shape = 's32[1]{0}', space=sflag, size = 0x4, scoped, tag = 'scoped memory for tpu_custom_call.1']
    #allocation7 [shape = 'u8[12288]{0}', space=vmem, size = 0x3000, scoped, tag = 'output window, operand 0, single buffered']
    %7 = vsyncpa [#allocation3], 0
    %8 = vsyncpa [#allocation6], 0
    %9 = vsyncpa [#allocation4], 0
    // Predicated region
    $region2: #{tpu_custom_call.1} parent=1 // pred_check
      _
    $region3: #{tpu_custom_call.1} parent=1 // pred_check_branch
      %11 = sbr.rel (0) target = $region5
    $region4: #{tpu_custom_call.1} parent=1 // pred_region
      %13 = vsyncadd [#allocation3], 0
      %s14 = sshll.u32 %s0, 4
      %s15 = int_to_ptr.hbm [resolvable:$true] %s14
      %s16 = sshll.u32 [#allocation2], 4
      %s17 = int_to_ptr.vmem [resolvable:$true] %s16
      %22 = dma.hbm_to_vmem [thread:$0]  %s15, 256, %s17, [#allocation3], 128, 128, 8
    $region5: #{tpu_custom_call.1} parent=1 // pred_fallthru
      _
    // Predicated region
    $region6: #{tpu_custom_call.1} parent=1 // pred_check
      _
    $region7: #{tpu_custom_call.1} parent=1 // pred_check_branch
      %24 = sbr.rel (0) target = $region9
    $region8: #{tpu_custom_call.1} parent=1 // pred_region
      %26 = vsyncadd [#allocation6], 0
      %s27 = sshll.u32 %s1, 4
      %s28 = int_to_ptr.hbm [resolvable:$true] %s27
      %s29 = sshll.u32 [#allocation5], 4
      %s30 = int_to_ptr.vmem [resolvable:$true] %s29
      %35 = dma.hbm_to_vmem [thread:$0]  %s28, 256, %s30, [#allocation6], 128, 128, 8
    $region9: #{tpu_custom_call.1} parent=1 // pred_fallthru
      _
    // Predicated region
    $region10: #{tpu_custom_call.1} parent=1 // pred_check
      _
    $region11: #{tpu_custom_call.1} parent=1 // pred_check_branch
      %37 = sbr.rel (0) target = $region13
    $region12: #{tpu_custom_call.1} parent=1 // pred_region
      %39 = dma.done [#allocation3], 256
    $region13: #{tpu_custom_call.1} parent=1 // pred_fallthru
      _
    // Predicated region
    $region14: #{tpu_custom_call.1} parent=1 // pred_check
      _
    $region15: #{tpu_custom_call.1} parent=1 // pred_check_branch
      %41 = sbr.rel (0) target = $region17
    $region16: #{tpu_custom_call.1} parent=1 // pred_region
      %43 = dma.done [#allocation6], 256
    $region17: #{tpu_custom_call.1} parent=1 // pred_fallthru
      _
    %p44 = scmp.eq.s32.totalorder 0, 0
    // Predicated region
    $region18: #{tpu_custom_call.1} parent=1 // pred_check
      %p45 = pneg %p44
    $region19: #{tpu_custom_call.1} parent=1 // pred_check_branch
      %47 = sbr.rel (%p45) target = $region21
    $region20: #{tpu_custom_call.1} parent=1 // pred_region
      %48 = vst [vmem:[#allocation7] sm:$0xff] 0.0
      %49 = vst [vmem:[#allocation7 + $0x8] sm:$0xff] 0.0
      %50 = vst [vmem:[#allocation7 + $0x10] sm:$0xff] 0.0
    $region21: #{tpu_custom_call.1} parent=1 // pred_fallthru
      _
    %v51 = vld [vmem:[#allocation2] sm:$0xff]
    %v52 = vld [vmem:[#allocation2 + $0x8] sm:$0xff]
    %v53 = vmul.f32 %v51, 0.5
    %v54 = vmul.f32 %v52, 0.5
    %v55 = vtanh.pop %v53
    %v56 = vtanh.pop %v54
    %v57 = vadd.f32 %v55, 1.0
    %v58 = vadd.f32 %v56, 1.0
    %v59 = vmul.f32 %v57, 0.5
    %v60 = vmul.f32 %v58, 0.5
    %v61 = vld [vmem:[#allocation5] sm:$0xff]
    %v62 = vld [vmem:[#allocation5 + $0x8] sm:$0xff]
    %v63 = vmul.f32 %v59, %v61
    %v64 = vmul.f32 %v60, %v62
    %v65 = vadd.f32 %v63, %v64
    %v66 = vadd.f32 %v65, 0.0
    %v67 = vadd.f32 %v59, %v60
    %v68 = vadd.f32 %v67, 0.0
    %v69 = vadd.f32 %v61, %v62
    %v70 = vadd.f32 %v69, 0.0
    %v71 = vld [vmem:[#allocation7] sm:$0xff]
    %v72 = vadd.f32 %v71, %v66
    %73 = vst [vmem:[#allocation7] sm:$0xff] %v72
    %s74 = scalar_lea.vmem [#allocation7], 8
    %v75 = vld [vmem:[%s74] sm:$0xff]
    %v76 = vadd.f32 %v75, %v68
    %77 = vst [vmem:[%s74] sm:$0xff] %v76
    %s78 = scalar_lea.vmem [#allocation7], 16
    %v79 = vld [vmem:[%s78] sm:$0xff]
    %v80 = vadd.f32 %v79, %v70
    %81 = vst [vmem:[%s78] sm:$0xff] %v80
    // Predicated region
    $region22: #{tpu_custom_call.1} parent=1 // pred_check
      _
    $region23: #{tpu_custom_call.1} parent=1 // pred_check_branch
      %83 = sbr.rel (0) target = $region25
    $region24: #{tpu_custom_call.1} parent=1 // pred_region
      %85 = vsyncadd [#allocation4], 0
      %s86 = sshll.u32 [#allocation7], 4
      %s87 = int_to_ptr.vmem [resolvable:$true] %s86
      %s88 = sshll.u32 %s2, 4
      %s89 = int_to_ptr.hbm [resolvable:$true] %s88
      %94 = dma.vmem_to_hbm [thread:$0]  %s87, 384, %s89, [#allocation4], 128, 128, 8
    $region25: #{tpu_custom_call.1} parent=1 // pred_fallthru
      _
    // Predicated region
    $region26: #{tpu_custom_call.1} parent=1 // pred_check
      _
    $region27: #{tpu_custom_call.1} parent=1 // pred_check_branch
      %96 = sbr.rel (0) target = $region29
    $region28: #{tpu_custom_call.1} parent=1 // pred_region
      %98 = dma.done [#allocation4], 384
    $region29: #{tpu_custom_call.1} parent=1 // pred_fallthru
      _
    %99 = vsyncpa [#allocation3], 1
    %100 = vsyncpa [#allocation6], 1
    %101 = vsyncpa [#allocation4], 1

</llo_original>
